<compile_context>
chip_gen: v7x
topology: tpu7x:2x2x1
jax: 0.10.0
libtpu: 0.0.40
codegen_flags: <defaults>
</compile_context>

<pallas_src>
import functools

import numpy as np
import jax
import jax.numpy as jnp
from jax.experimental import pallas as pl
from jax.experimental.pallas import tpu as pltpu


def _round_up(x, m):
    return ((x + m - 1) // m) * m


def _da_loss_kernel(missed_ref, idx_ref, idy_ref, x_ref, y_ref,
                    aff_ref, loss_ref, ypad_ref, *, M):
    """Data-association loss for one block of B batch items.

    Block shapes (grid step g over batch tiles of size B):
      missed_ref : SMEM (1, 1) f32     missed-detection logit (scalar)
      idx_ref    : VMEM (B, N, 1) i32  first ids (-1 == invalid row)
      idy_ref    : VMEM (B, 1, M) i32  second ids
      x_ref      : VMEM (B, N, D) bf16 first embeddings
      y_ref      : VMEM (B, M, D) bf16 second embeddings
      aff_ref    : VMEM (B, N, Mp) bf16  out: [cos | missed | -1e9 pad]
      loss_ref   : VMEM (B, 1, Lp) f32   out: lanes 0..3 = [cos_sum, bce, ce, n_valid]
      ypad_ref   : VMEM (B, Mp, D) bf16  scratch: zero-padded normalized y
    """
    eps = 1e-8
    margin = 0.5
    neg_big = -1e9

    x = x_ref[...]                     # (B, N, D) bf16
    y = y_ref[...]                     # (B, M, D) bf16
    idx = idx_ref[...]                 # (B, N, 1) int32
    idy = idy_ref[...]                 # (B, 1, M) int32
    missed = missed_ref[0, 0]

    B, N, D = x.shape
    Mp = ypad_ref.shape[1]
    Lp = loss_ref.shape[2]

    # --- normalize in f32, feed the MXU bf16: its output is already cosine ---
    # (kernel clamps per-vector norms; reference clamps the norm product --
    # differs only for near-zero embeddings)
    xf = x.astype(jnp.float32)
    yf = y.astype(jnp.float32)
    x_n = (xf * jax.lax.rsqrt(
        jnp.maximum(jnp.sum(xf * xf, axis=-1, keepdims=True), eps * eps))
           ).astype(jnp.bfloat16)
    y_n = (yf * jax.lax.rsqrt(
        jnp.maximum(jnp.sum(yf * yf, axis=-1, keepdims=True), eps * eps))
           ).astype(jnp.bfloat16)

    # --- pad y to Mp rows in VMEM scratch (pad rows rewritten every step so a
    # megacore split of the parallel grid axis stays correct) -> pad cosine
    # columns are exactly 0 ------------------------------------------------
    ypad_ref[:, M:, :] = jnp.zeros((B, Mp - M, D), jnp.bfloat16)
    ypad_ref[:, :M, :] = y_n

    cos = jnp.einsum('bnd,bmd->bnm', x_n, ypad_ref[...],
                     preferred_element_type=jnp.float32)        # (B, N, Mp) f32

    lane = jax.lax.broadcasted_iota(jnp.int32, (B, N, Mp), 2)
    in_m = lane < M                                             # real cosine lanes

    valid = idx != -1                                           # (B, N, 1) bool
    valid_f = valid.astype(jnp.float32)
    nv = jnp.sum(valid_f, axis=1, keepdims=True)                # (B, 1, 1)
    nv_safe = jnp.maximum(nv, 1.0)

    # --- first-match target (PyTorch np.where()[0][0]); index M == "missed" --
    lane_m = jax.lax.broadcasted_iota(jnp.int32, (B, N, M), 2)
    match = idx == idy                                          # (B, N, M) bool
    tgt_col = jnp.min(jnp.where(match, lane_m, M),
                      axis=2, keepdims=True)                    # (B, N, 1) int32
    is_tgt = lane == tgt_col                                    # (B, N, Mp) bool

    # --- lane-dense logits slab: [cos | missed | -1e9 pad] -------------------
    # pad lanes contribute exactly 0 to BCE and to the softmax sum.
    logits = jnp.where(lane == M, missed, jnp.where(in_m, cos, neg_big))

    # --- CosineEmbeddingLoss(margin=0.5): mean over M per valid row, summed --
    # pad / missed lanes have cos == 0 -> relu(0 - margin) == 0, no lane mask.
    pos = is_tgt & in_m
    per_cos = jnp.where(pos, 1.0 - cos, jnp.maximum(cos - margin, 0.0))
    cos_sum = jnp.sum(jnp.sum(per_cos, axis=2, keepdims=True) * valid_f,
                      axis=1, keepdims=True) * (1.0 / M)        # (B, 1, 1)

    # --- BCEWithLogitsLoss over the (n_valid, M+1) affinity -------------------
    tgt_sel = jnp.where(is_tgt, logits, 0.0)                    # one-hot pick
    per_bce = (jnp.maximum(logits, 0.0) - tgt_sel
               + jnp.log(1.0 + jnp.exp(-jnp.abs(logits))))
    bce_sum = jnp.sum(jnp.sum(per_bce, axis=2, keepdims=True) * valid_f,
                      axis=1, keepdims=True)                    # (B, 1, 1)
    bce = bce_sum / (nv_safe * (M + 1))

    # --- CrossEntropyLoss over the (n_valid, M+1) affinity --------------------
    rmax = jnp.max(logits, axis=2, keepdims=True)               # (B, N, 1)
    lse = rmax + jnp.log(jnp.sum(jnp.exp(logits - rmax),
                                 axis=2, keepdims=True))        # (B, N, 1)
    tgt_logit = jnp.sum(tgt_sel, axis=2, keepdims=True)         # (B, N, 1)
    ce_sum = jnp.sum((lse - tgt_logit) * valid_f, axis=1, keepdims=True)
    ce = ce_sum / nv_safe

    # --- single full-block, lane-dense stores ---------------------------------
    # NOTE: invalid rows keep their raw logits (the host slices ids != -1
    # before consuming the affinity slab); lanes > M hold -1e9.
    aff_ref[...] = logits.astype(jnp.bfloat16)

    l_lane = jax.lax.broadcasted_iota(jnp.int32, (B, 1, Lp), 2)
    loss_ref[...] = jnp.where(l_lane == 0, cos_sum,
                    jnp.where(l_lane == 1, bce,
                    jnp.where(l_lane == 2, ce,
                    jnp.where(l_lane == 3, nv, 0.0))))


def run_da_kernel(first_embed, first_ids, second_embed, second_ids,
                  missed_variable, block_b=8):
    """Returns (aff (bs, N, M+1) f32, per_batch (bs, 4) f32) device arrays."""
    bs, N, D = first_embed.shape
    M = second_embed.shape[1]
    Mp = _round_up(M + 1, 128)     # lane-dense affinity slab width
    Lp = 128                       # lane-dense per-item loss slab width

    # bf16 end-to-end: halves x/y/aff HBM + VMEM traffic, bf16-native MXU on
    # v5e/v6e/v7x.  (Loss sums stay f32.)  Upstream producers should emit bf16.
    x = first_embed.astype(jnp.bfloat16)
    y = second_embed.astype(jnp.bfloat16)
    idx = first_ids.astype(jnp.int32).reshape(bs, N, 1)
    idy = second_ids.astype(jnp.int32).reshape(bs, 1, M)
    missed = jnp.asarray(missed_variable, jnp.float32).reshape(1, 1)

    # Batch tile: keep >= 2 grid steps when possible so the "parallel" batch
    # axis can split across v7x's two TensorCores.  No host-side bs padding /
    # concat: Pallas handles a ragged final block, and its garbage only lands
    # in per-item output rows that are never consumed.
    B = max(1, min(block_b, pl.cdiv(bs, 2))) if bs > 1 else 1
    G = pl.cdiv(bs, B)

    # Explicit scoped-VMEM budget: double-buffered I/O blocks + y-pad scratch
    # + ~12 live (B, N, Mp) f32 temporaries; capped at 64 MiB (v7x physical).
    bytes_blocks = 2 * (B * N * D * 2 + B * M * D * 2 + B * N * 4 + B * M * 4
                        + B * N * Mp * 2 + B * Lp * 4)
    bytes_scratch = B * Mp * D * 2
    bytes_temps = 12 * B * N * Mp * 4
    vmem_limit = int(min(64 * 2 ** 20,
                         max(32 * 2 ** 20,
                             2 * (bytes_blocks + bytes_scratch + bytes_temps))))

    kernel = functools.partial(_da_loss_kernel, M=M)
    # TODO(synk): for production-sized N, add a second (parallel) grid axis
    # tiling N into ~128-row chunks and emit per-tile partial sums, moving the
    # /nv normalizations to the host (assemble_loss already iterates per item).
    aff, per_batch = pl.pallas_call(
        kernel,
        out_shape=(jax.ShapeDtypeStruct((bs, N, Mp), jnp.bfloat16),
                   jax.ShapeDtypeStruct((bs, 1, Lp), jnp.float32)),
        grid=(G,),
        in_specs=[
            pl.BlockSpec(memory_space=pltpu.MemorySpace.SMEM),        # missed
            pl.BlockSpec((B, N, 1), lambda g: (g, 0, 0)),             # idx
            pl.BlockSpec((B, 1, M), lambda g: (g, 0, 0)),             # idy
            pl.BlockSpec((B, N, D), lambda g: (g, 0, 0)),             # x
            pl.BlockSpec((B, M, D), lambda g: (g, 0, 0)),             # y
        ],
        out_specs=(
            # if xprof shows the aff writeback DMA exposed, raise this spec's
            # depth with pipeline_mode=pl.Buffered(3)
            pl.BlockSpec((B, N, Mp), lambda g: (g, 0, 0)),
            pl.BlockSpec((B, 1, Lp), lambda g: (g, 0, 0)),
        ),
        scratch_shapes=[pltpu.VMEM((B, Mp, D), jnp.bfloat16)],
        compiler_params=pltpu.CompilerParams(
            dimension_semantics=("parallel",),
            vmem_limit_bytes=vmem_limit),
    )(missed, idx, idy, x, y)

    aff = aff[:, :, :M + 1].astype(jnp.float32)
    per_batch = per_batch[:, 0, :4]
    return aff, per_batch


def assemble_loss(aff, per_batch, first_ids, bs):
    """Host glue: replicate the PyTorch accumulation loop exactly."""
    # TODO(synk): the variable-length aff_matrix list and the per-iteration
    # "/ bs" rescale are inherently host-side Python; they cannot be emitted
    # from the kernel.
    pb = np.asarray(jax.device_get(per_batch)).reshape(bs, 4)
    aff_np = np.asarray(jax.device_get(aff))
    ids_np = np.asarray(jax.device_get(first_ids))
    loss = {'cosine': 0.0, 'binary_cross_entropy': 0.0, 'cross_entropy': 0.0}
    aff_matrix = []
    for i in range(bs):
        if pb[i, 3] == 0:          # no valid first objects -> `continue`
            continue
        loss['cosine'] += float(pb[i, 0])
        loss['binary_cross_entropy'] += float(pb[i, 1])
        loss['cross_entropy'] += float(pb[i, 2])
        aff_matrix.append(aff_np[i][ids_np[i] != -1])   # only valid rows
        loss = {k: v / bs for k, v in loss.items()}      # PyTorch does this
    return loss, aff_matrix                              # inside the loop


def reference(first_embed, first_ids, second_embed, second_ids, missed_var):
    """NumPy re-implementation of the PyTorch forward (for verification)."""
    fe = np.asarray(first_embed, np.float64)
    se = np.asarray(second_embed, np.float64)
    fid = np.asarray(first_ids)
    sid = np.asarray(second_ids)
    bs = fe.shape[0]
    eps, margin = 1e-8, 0.5
    loss = {'cosine': 0.0, 'binary_cross_entropy': 0.0, 'cross_entropy': 0.0}
    aff_matrix = []
    for i in range(bs):
        vmask = fid[i] != -1
        x = fe[i][vmask]
        y = se[i]
        if x.shape[0] == 0:
            continue
        id_y, id_x = sid[i], fid[i][vmask]
        M = len(id_y)
        target = np.array([np.where(id_y == s)[0][0] if s in id_y else M
                           for s in id_x])
        xn = np.linalg.norm(x, axis=1, keepdims=True)
        yn = np.linalg.norm(y, axis=1, keepdims=True)
        cos = (x @ y.T) / np.maximum(xn * yn.T, eps)
        for j in range(x.shape[0]):
            ct = -np.ones(M)
            if target[j] != M:
                ct[target[j]] = 1
            per = np.where(ct == 1, 1 - cos[j],
                           np.maximum(cos[j] - margin, 0.0))
            loss['cosine'] += per.mean()
        aff = np.concatenate([cos, np.full((x.shape[0], 1), missed_var)], 1)
        aff_matrix.append(aff)
        onehot = np.eye(M + 1)[target]
        bce = (np.maximum(aff, 0) - aff * onehot
               + np.log1p(np.exp(-np.abs(aff))))
        loss['binary_cross_entropy'] += bce.mean()
        rmax = aff.max(axis=1, keepdims=True)
        lse = rmax[:, 0] + np.log(np.sum(np.exp(aff - rmax), axis=1))
        ce = lse - aff[np.arange(len(target)), target]
        loss['cross_entropy'] += ce.mean()
        loss = {k: v / bs for k, v in loss.items()}
    return loss, aff_matrix


if __name__ == "__main__":
    bs, N, M, D = 2, 8, 8, 32
    key = jax.random.PRNGKey(0)
    k1, k2 = jax.random.split(key)
    first_embed = jax.random.normal(k1, (bs, N, D), jnp.float32)
    second_embed = jax.random.normal(k2, (bs, M, D), jnp.float32)
    # second_ids row 0 contains a duplicate (3) to exercise first-match targets.
    first_ids = jnp.array([[3, 1, -1, 7, 2, 100, 5, 0],
                           [10, 11, 12, 13, 14, 15, 16, 17]], jnp.int32)
    second_ids = jnp.array([[0, 1, 2, 3, 3, 5, 6, 7],
                            [17, 16, 15, 14, 13, 99, 11, 10]], jnp.int32)
    missed_variable = 0.3

    aff, per_batch = run_da_kernel(first_embed, first_ids,
                                   second_embed, second_ids, missed_variable)
    jax.block_until_ready((aff, per_batch))

    loss, aff_matrix = assemble_loss(aff, per_batch, first_ids, bs)
    ref_loss, ref_aff = reference(first_embed, first_ids,
                                  second_embed, second_ids, missed_variable)

    for k in loss:
        assert np.allclose(loss[k], ref_loss[k], rtol=2e-2, atol=2e-2), \
            (k, loss[k], ref_loss[k])
    assert len(aff_matrix) == len(ref_aff)
    for a, r in zip(aff_matrix, ref_aff):
        assert a.shape == r.shape
        assert np.allclose(a, r, rtol=2e-2, atol=2e-2)

    print("KERNEL_OK")
</pallas_src>

<mosaic_0001>
module attributes {stable_mosaic.version = 11 : i64} {
  func.func @_da_loss_kernel(%arg0: i32, %arg1: memref<1x1xf32, #tpu.memory_space<smem>>, %arg2: memref<1x8x1xi32, #tpu.memory_space<vmem>>, %arg3: memref<1x1x8xi32, #tpu.memory_space<vmem>>, %arg4: memref<1x8x32xbf16, #tpu.memory_space<vmem>>, %arg5: memref<1x8x32xbf16, #tpu.memory_space<vmem>>, %arg6: memref<1x8x128xbf16, #tpu.memory_space<vmem>>, %arg7: memref<1x1x128xf32, #tpu.memory_space<vmem>>, %arg8: memref<1x128x32xbf16, #tpu.memory_space<vmem>>) attributes {dimension_semantics = [#tpu.dimension_semantics<parallel>], iteration_bounds = array<i64: 2>, scalar_prefetch = 0 : i64, scratch_operands = 1 : i64, tpu.core_type = #tpu.core_type<tc>, window_params = [{transform_indices = @transform_0, window_bounds = array<i64: 1, 1>}, {transform_indices = @transform_1, window_bounds = array<i64: 1, 8, 1>}, {transform_indices = @transform_2, window_bounds = array<i64: 1, 1, 8>}, {transform_indices = @transform_3, window_bounds = array<i64: 1, 8, 32>}, {transform_indices = @transform_4, window_bounds = array<i64: 1, 8, 32>}, {transform_indices = @transform_5, window_bounds = array<i64: 1, 8, 128>}, {transform_indices = @transform_6, window_bounds = array<i64: 1, 1, 128>}]} {
    %c0 = arith.constant 0 : index
    %c0_0 = arith.constant 0 : index
    %c0_1 = arith.constant 0 : index
    %0 = vector.load %arg4[%c0, %c0_0, %c0_1] : memref<1x8x32xbf16, #tpu.memory_space<vmem>>, vector<1x8x32xbf16>
    %c0_2 = arith.constant 0 : index
    %c0_3 = arith.constant 0 : index
    %c0_4 = arith.constant 0 : index
    %1 = vector.load %arg5[%c0_2, %c0_3, %c0_4] : memref<1x8x32xbf16, #tpu.memory_space<vmem>>, vector<1x8x32xbf16>
    %c0_5 = arith.constant 0 : index
    %c0_6 = arith.constant 0 : index
    %c0_7 = arith.constant 0 : index
    %2 = vector.load %arg2[%c0_5, %c0_6, %c0_7] : memref<1x8x1xi32, #tpu.memory_space<vmem>>, vector<1x8x1xi32>
    %c0_8 = arith.constant 0 : index
    %c0_9 = arith.constant 0 : index
    %c0_10 = arith.constant 0 : index
    %3 = vector.load %arg3[%c0_8, %c0_9, %c0_10] : memref<1x1x8xi32, #tpu.memory_space<vmem>>, vector<1x1x8xi32>
    %c0_11 = arith.constant 0 : index
    %c0_12 = arith.constant 0 : index
    %4 = memref.load %arg1[%c0_11, %c0_12] : memref<1x1xf32, #tpu.memory_space<smem>>
    %5 = arith.extf %0 : vector<1x8x32xbf16> to vector<1x8x32xf32>
    %6 = arith.extf %1 : vector<1x8x32xbf16> to vector<1x8x32xf32>
    %7 = arith.mulf %5, %5 : vector<1x8x32xf32>
    %cst = arith.constant dense<0.000000e+00> : vector<1x8xf32>
    %8 = vector.multi_reduction <add>, %7, %cst [2] : vector<1x8x32xf32> to vector<1x8xf32>
    %9 = vector.shape_cast %8 : vector<1x8xf32> to vector<1x8x1xf32>
    %cst_13 = arith.constant 1.000000e-16 : f32
    %10 = vector.broadcast %cst_13 : f32 to vector<1x8x1xf32>
    %11 = arith.maximumf %9, %10 : vector<1x8x1xf32>
    %12 = math.rsqrt %11 : vector<1x8x1xf32>
    %13 = vector.broadcast %12 : vector<1x8x1xf32> to vector<1x8x32xf32>
    %14 = arith.mulf %5, %13 : vector<1x8x32xf32>
    %15 = arith.truncf %14 : vector<1x8x32xf32> to vector<1x8x32xbf16>
    %16 = arith.mulf %6, %6 : vector<1x8x32xf32>
    %cst_14 = arith.constant dense<0.000000e+00> : vector<1x8xf32>
    %17 = vector.multi_reduction <add>, %16, %cst_14 [2] : vector<1x8x32xf32> to vector<1x8xf32>
    %18 = vector.shape_cast %17 : vector<1x8xf32> to vector<1x8x1xf32>
    %cst_15 = arith.constant 1.000000e-16 : f32
    %19 = vector.broadcast %cst_15 : f32 to vector<1x8x1xf32>
    %20 = arith.maximumf %18, %19 : vector<1x8x1xf32>
    %21 = math.rsqrt %20 : vector<1x8x1xf32>
    %22 = vector.broadcast %21 : vector<1x8x1xf32> to vector<1x8x32xf32>
    %23 = arith.mulf %6, %22 : vector<1x8x32xf32>
    %24 = arith.truncf %23 : vector<1x8x32xf32> to vector<1x8x32xbf16>
    %cst_16 = arith.constant 0.000000e+00 : bf16
    %25 = vector.broadcast %cst_16 : bf16 to vector<1x120x32xbf16>
    %c0_17 = arith.constant 0 : index
    %c8 = arith.constant 8 : index
    %c0_18 = arith.constant 0 : index
    %26 = vector.load %arg8[%c0_17, %c8, %c0_18] : memref<1x128x32xbf16, #tpu.memory_space<vmem>>, vector<1x120x32xbf16>
    tpu.vector_store %arg8[%c0_17, %c8, %c0_18], %25 {strides = array<i32>} : memref<1x128x32xbf16, #tpu.memory_space<vmem>>, vector<1x120x32xbf16>,
    %c0_19 = arith.constant 0 : index
    %c0_20 = arith.constant 0 : index
    %c0_21 = arith.constant 0 : index
    %27 = vector.load %arg8[%c0_19, %c0_20, %c0_21] : memref<1x128x32xbf16, #tpu.memory_space<vmem>>, vector<1x8x32xbf16>
    tpu.vector_store %arg8[%c0_19, %c0_20, %c0_21], %24 {strides = array<i32>} : memref<1x128x32xbf16, #tpu.memory_space<vmem>>, vector<1x8x32xbf16>,
    %c0_22 = arith.constant 0 : index
    %c0_23 = arith.constant 0 : index
    %c0_24 = arith.constant 0 : index
    %28 = vector.load %arg8[%c0_22, %c0_23, %c0_24] : memref<1x128x32xbf16, #tpu.memory_space<vmem>>, vector<1x128x32xbf16>
    "tpu.trace_start"() <{level = 10 : i32, message = "bnd,bmd->bnm"}> : () -> ()
    %cst_25 = arith.constant dense<0.000000e+00> : vector<1x8x128xf32>
    %29 = tpu.matmul %15, %28, %cst_25 {dimension_numbers = #tpu.dot_dimension_numbers<[2], [2], [1], [1], [0, 0, 0, 1, 1, 1], [0], [0]>} : vector<1x8x32xbf16>, vector<1x128x32xbf16>, vector<1x8x128xf32> -> vector<1x8x128xf32>
    "tpu.trace_stop"() : () -> ()
    %30 = tpu.iota {dimensions = array<i32: 2>} : vector<1x8x128xi32>
    %c8_i32 = arith.constant 8 : i32
    %31 = vector.broadcast %c8_i32 : i32 to vector<1x8x128xi32>
    %32 = arith.cmpi slt, %30, %31 : vector<1x8x128xi32>
    %c-1_i32 = arith.constant -1 : i32
    %33 = vector.broadcast %c-1_i32 : i32 to vector<1x8x1xi32>
    %34 = arith.cmpi ne, %2, %33 : vector<1x8x1xi32>
    %35 = arith.extui %34 : vector<1x8x1xi1> to vector<1x8x1xi32>
    %36 = arith.sitofp %35 : vector<1x8x1xi32> to vector<1x8x1xf32>
    %cst_26 = arith.constant dense<0.000000e+00> : vector<1x1xf32>
    %37 = vector.multi_reduction <add>, %36, %cst_26 [1] : vector<1x8x1xf32> to vector<1x1xf32>
    %38 = vector.shape_cast %37 : vector<1x1xf32> to vector<1x1x1xf32>
    %cst_27 = arith.constant 1.000000e+00 : f32
    %39 = vector.broadcast %cst_27 : f32 to vector<1x1x1xf32>
    %40 = arith.maximumf %38, %39 : vector<1x1x1xf32>
    %41 = tpu.iota {dimensions = array<i32: 2>} : vector<1x8x8xi32>
    %42 = vector.broadcast %2 : vector<1x8x1xi32> to vector<1x8x8xi32>
    %43 = vector.broadcast %3 : vector<1x1x8xi32> to vector<1x8x8xi32>
    %44 = arith.cmpi eq, %42, %43 : vector<1x8x8xi32>
    %c8_i32_28 = arith.constant 8 : i32
    %45 = vector.broadcast %c8_i32_28 : i32 to vector<1x8x8xi32>
    %46 = arith.select %44, %41, %45 : vector<1x8x8xi1>, vector<1x8x8xi32>
    %cst_29 = arith.constant dense<2147483647> : vector<1x8xi32>
    %47 = vector.multi_reduction <minsi>, %46, %cst_29 [2] : vector<1x8x8xi32> to vector<1x8xi32>
    %48 = vector.shape_cast %47 : vector<1x8xi32> to vector<1x8x1xi32>
    %49 = vector.broadcast %48 : vector<1x8x1xi32> to vector<1x8x128xi32>
    %50 = arith.cmpi eq, %30, %49 : vector<1x8x128xi32>
    %c8_i32_30 = arith.constant 8 : i32
    %51 = vector.broadcast %c8_i32_30 : i32 to vector<1x8x128xi32>
    %52 = arith.cmpi eq, %30, %51 : vector<1x8x128xi32>
    %cst_31 = arith.constant -1.000000e+09 : f32
    %53 = vector.broadcast %cst_31 : f32 to vector<1x8x128xf32>
    %54 = arith.select %32, %29, %53 : vector<1x8x128xi1>, vector<1x8x128xf32>
    %55 = vector.broadcast %4 : f32 to vector<1x8x128xf32>
    %56 = arith.select %52, %55, %54 : vector<1x8x128xi1>, vector<1x8x128xf32>
    %57 = arith.andi %50, %32 : vector<1x8x128xi1>
    %cst_32 = arith.constant 1.000000e+00 : f32
    %58 = vector.broadcast %cst_32 : f32 to vector<1x8x128xf32>
    %59 = arith.subf %58, %29 : vector<1x8x128xf32>
    %cst_33 = arith.constant 5.000000e-01 : f32
    %60 = vector.broadcast %cst_33 : f32 to vector<1x8x128xf32>
    %61 = arith.subf %29, %60 : vector<1x8x128xf32>
    %cst_34 = arith.constant 0.000000e+00 : f32
    %62 = vector.broadcast %cst_34 : f32 to vector<1x8x128xf32>
    %63 = arith.maximumf %61, %62 : vector<1x8x128xf32>
    %64 = arith.select %57, %59, %63 : vector<1x8x128xi1>, vector<1x8x128xf32>
    %cst_35 = arith.constant dense<0.000000e+00> : vector<1x8xf32>
    %65 = vector.multi_reduction <add>, %64, %cst_35 [2] : vector<1x8x128xf32> to vector<1x8xf32>
    %66 = vector.shape_cast %65 : vector<1x8xf32> to vector<1x8x1xf32>
    %67 = arith.mulf %66, %36 : vector<1x8x1xf32>
    %cst_36 = arith.constant dense<0.000000e+00> : vector<1x1xf32>
    %68 = vector.multi_reduction <add>, %67, %cst_36 [1] : vector<1x8x1xf32> to vector<1x1xf32>
    %69 = vector.shape_cast %68 : vector<1x1xf32> to vector<1x1x1xf32>
    %cst_37 = arith.constant 1.250000e-01 : f32
    %70 = vector.broadcast %cst_37 : f32 to vector<1x1x1xf32>
    %71 = arith.mulf %69, %70 : vector<1x1x1xf32>
    %cst_38 = arith.constant 0.000000e+00 : f32
    %72 = vector.broadcast %cst_38 : f32 to vector<1x8x128xf32>
    %73 = arith.select %50, %56, %72 : vector<1x8x128xi1>, vector<1x8x128xf32>
    %cst_39 = arith.constant 0.000000e+00 : f32
    %74 = vector.broadcast %cst_39 : f32 to vector<1x8x128xf32>
    %75 = arith.maximumf %56, %74 : vector<1x8x128xf32>
    %76 = arith.subf %75, %73 : vector<1x8x128xf32>
    %77 = math.absf %56 : vector<1x8x128xf32>
    %cst_40 = arith.constant 0.000000e+00 : f32
    %78 = vector.broadcast %cst_40 : f32 to vector<1x8x128xf32>
    %79 = arith.subf %78, %77 : vector<1x8x128xf32>
    %80 = math.exp %79 : vector<1x8x128xf32>
    %cst_41 = arith.constant 1.000000e+00 : f32
    %81 = vector.broadcast %cst_41 : f32 to vector<1x8x128xf32>
    %82 = arith.addf %81, %80 : vector<1x8x128xf32>
    %83 = math.log %82 : vector<1x8x128xf32>
    %84 = arith.addf %76, %83 : vector<1x8x128xf32>
    %cst_42 = arith.constant dense<0.000000e+00> : vector<1x8xf32>
    %85 = vector.multi_reduction <add>, %84, %cst_42 [2] : vector<1x8x128xf32> to vector<1x8xf32>
    %86 = vector.shape_cast %85 : vector<1x8xf32> to vector<1x8x1xf32>
    %87 = arith.mulf %86, %36 : vector<1x8x1xf32>
    %cst_43 = arith.constant dense<0.000000e+00> : vector<1x1xf32>
    %88 = vector.multi_reduction <add>, %87, %cst_43 [1] : vector<1x8x1xf32> to vector<1x1xf32>
    %89 = vector.shape_cast %88 : vector<1x1xf32> to vector<1x1x1xf32>
    %cst_44 = arith.constant 9.000000e+00 : f32
    %90 = vector.broadcast %cst_44 : f32 to vector<1x1x1xf32>
    %91 = arith.mulf %40, %90 : vector<1x1x1xf32>
    %92 = arith.divf %89, %91 : vector<1x1x1xf32>
    %cst_45 = arith.constant dense<0xFF800000> : vector<1x8xf32>
    %93 = vector.multi_reduction <maximumf>, %56, %cst_45 [2] : vector<1x8x128xf32> to vector<1x8xf32>
    %94 = vector.shape_cast %93 : vector<1x8xf32> to vector<1x8x1xf32>
    %95 = vector.broadcast %94 : vector<1x8x1xf32> to vector<1x8x128xf32>
    %96 = arith.subf %56, %95 : vector<1x8x128xf32>
    %97 = math.exp %96 : vector<1x8x128xf32>
    %cst_46 = arith.constant dense<0.000000e+00> : vector<1x8xf32>
    %98 = vector.multi_reduction <add>, %97, %cst_46 [2] : vector<1x8x128xf32> to vector<1x8xf32>
    %99 = vector.shape_cast %98 : vector<1x8xf32> to vector<1x8x1xf32>
    %100 = math.log %99 : vector<1x8x1xf32>
    %101 = arith.addf %94, %100 : vector<1x8x1xf32>
    %cst_47 = arith.constant dense<0.000000e+00> : vector<1x8xf32>
    %102 = vector.multi_reduction <add>, %73, %cst_47 [2] : vector<1x8x128xf32> to vector<1x8xf32>
    %103 = vector.shape_cast %102 : vector<1x8xf32> to vector<1x8x1xf32>
    %104 = arith.subf %101, %103 : vector<1x8x1xf32>
    %105 = arith.mulf %104, %36 : vector<1x8x1xf32>
    %cst_48 = arith.constant dense<0.000000e+00> : vector<1x1xf32>
    %106 = vector.multi_reduction <add>, %105, %cst_48 [1] : vector<1x8x1xf32> to vector<1x1xf32>
    %107 = vector.shape_cast %106 : vector<1x1xf32> to vector<1x1x1xf32>
    %108 = arith.divf %107, %40 : vector<1x1x1xf32>
    %109 = arith.truncf %56 : vector<1x8x128xf32> to vector<1x8x128xbf16>
    %c0_49 = arith.constant 0 : index
    %c0_50 = arith.constant 0 : index
    %c0_51 = arith.constant 0 : index
    %110 = vector.load %arg6[%c0_49, %c0_50, %c0_51] : memref<1x8x128xbf16, #tpu.memory_space<vmem>>, vector<1x8x128xbf16>
    tpu.vector_store %arg6[%c0_49, %c0_50, %c0_51], %109 {strides = array<i32>} : memref<1x8x128xbf16, #tpu.memory_space<vmem>>, vector<1x8x128xbf16>,
    %111 = tpu.iota {dimensions = array<i32: 2>} : vector<1x1x128xi32>
    %c0_i32 = arith.constant 0 : i32
    %112 = vector.broadcast %c0_i32 : i32 to vector<1x1x128xi32>
    %113 = arith.cmpi eq, %111, %112 : vector<1x1x128xi32>
    %c1_i32 = arith.constant 1 : i32
    %114 = vector.broadcast %c1_i32 : i32 to vector<1x1x128xi32>
    %115 = arith.cmpi eq, %111, %114 : vector<1x1x128xi32>
    %c2_i32 = arith.constant 2 : i32
    %116 = vector.broadcast %c2_i32 : i32 to vector<1x1x128xi32>
    %117 = arith.cmpi eq, %111, %116 : vector<1x1x128xi32>
    %c3_i32 = arith.constant 3 : i32
    %118 = vector.broadcast %c3_i32 : i32 to vector<1x1x128xi32>
    %119 = arith.cmpi eq, %111, %118 : vector<1x1x128xi32>
    %cst_52 = arith.constant 0.000000e+00 : f32
    %120 = vector.shape_cast %38 : vector<1x1x1xf32> to vector<1x1x1xf32>
    %121 = vector.broadcast %120 : vector<1x1x1xf32> to vector<1x1x128xf32>
    %122 = vector.broadcast %cst_52 : f32 to vector<1x1x128xf32>
    %123 = arith.select %119, %121, %122 : vector<1x1x128xi1>, vector<1x1x128xf32>
    %124 = vector.shape_cast %108 : vector<1x1x1xf32> to vector<1x1x1xf32>
    %125 = vector.broadcast %124 : vector<1x1x1xf32> to vector<1x1x128xf32>
    %126 = arith.select %117, %125, %123 : vector<1x1x128xi1>, vector<1x1x128xf32>
    %127 = vector.shape_cast %92 : vector<1x1x1xf32> to vector<1x1x1xf32>
    %128 = vector.broadcast %127 : vector<1x1x1xf32> to vector<1x1x128xf32>
    %129 = arith.select %115, %128, %126 : vector<1x1x128xi1>, vector<1x1x128xf32>
    %130 = vector.shape_cast %71 : vector<1x1x1xf32> to vector<1x1x1xf32>
    %131 = vector.broadcast %130 : vector<1x1x1xf32> to vector<1x1x128xf32>
    %132 = arith.select %113, %131, %129 : vector<1x1x128xi1>, vector<1x1x128xf32>
    %c0_53 = arith.constant 0 : index
    %c0_54 = arith.constant 0 : index
    %c0_55 = arith.constant 0 : index
    %133 = vector.load %arg7[%c0_53, %c0_54, %c0_55] : memref<1x1x128xf32, #tpu.memory_space<vmem>>, vector<1x1x128xf32>
    tpu.vector_store %arg7[%c0_53, %c0_54, %c0_55], %132 {strides = array<i32>} : memref<1x1x128xf32, #tpu.memory_space<vmem>>, vector<1x1x128xf32>,
    return
  }
  func.func @transform_0(%arg0: i32) -> (i32, i32) {
    %c0_i32 = arith.constant 0 : i32
    %c0_i32_0 = arith.constant 0 : i32
    %c0_i32_1 = arith.constant 0 : i32
    return %c0_i32, %c0_i32_0 : i32, i32
  }
  func.func @transform_1(%arg0: i32) -> (i32, i32, i32) {
    %c0_i32 = arith.constant 0 : i32
    %c0_i32_0 = arith.constant 0 : i32
    %c0_i32_1 = arith.constant 0 : i32
    return %arg0, %c0_i32, %c0_i32_0 : i32, i32, i32
  }
  func.func @transform_2(%arg0: i32) -> (i32, i32, i32) {
    %c0_i32 = arith.constant 0 : i32
    %c0_i32_0 = arith.constant 0 : i32
    %c0_i32_1 = arith.constant 0 : i32
    return %arg0, %c0_i32, %c0_i32_0 : i32, i32, i32
  }
  func.func @transform_3(%arg0: i32) -> (i32, i32, i32) {
    %c0_i32 = arith.constant 0 : i32
    %c0_i32_0 = arith.constant 0 : i32
    %c0_i32_1 = arith.constant 0 : i32
    return %arg0, %c0_i32, %c0_i32_0 : i32, i32, i32
  }
  func.func @transform_4(%arg0: i32) -> (i32, i32, i32) {
    %c0_i32 = arith.constant 0 : i32
    %c0_i32_0 = arith.constant 0 : i32
    %c0_i32_1 = arith.constant 0 : i32
    return %arg0, %c0_i32, %c0_i32_0 : i32, i32, i32
  }
  func.func @transform_5(%arg0: i32) -> (i32, i32, i32) {
    %c0_i32 = arith.constant 0 : i32
    %c0_i32_0 = arith.constant 0 : i32
    %c0_i32_1 = arith.constant 0 : i32
    return %arg0, %c0_i32, %c0_i32_0 : i32, i32, i32
  }
  func.func @transform_6(%arg0: i32) -> (i32, i32, i32) {
    %c0_i32 = arith.constant 0 : i32
    %c0_i32_0 = arith.constant 0 : i32
    %c0_i32_1 = arith.constant 0 : i32
    return %arg0, %c0_i32, %c0_i32_0 : i32, i32, i32
  }
}

</mosaic_0001>

<llo_original>
// kernel: tpu_custom_call.1
$region0: #{tpu_custom_call.1}
  #allocation0 [shape = 'u32[]', space=smem, size = 0x4, offset = 0x4, fixed_abs, tag = 'smem constant byte address 0x4 - core index']
  #allocation1 [shape = 'u32[144,128]{1,0:T(1,128)}', space=vmem, size = 0x12000, scoped, tag = 'internal scratch']
  #allocation2 [shape = 'bf16[1,128,32]{2,1,0:T(16,128)(2,1)}', space=vmem, size = 0x8000, scoped, tag = 'scratch operand']
  #allocation3 [shape = 'f32[1,1]{1,0:T(1,128)S(6)}', space=smem, size = 0x200, scoped, tag = 'scoped memory for tpu_custom_call.1']
  %s0 = inlined_call_operand.<no memory space> [shape: f32[1,1], index: 0, kind: input, shape index: {}]
  %s1 = inlined_call_operand.vmem [shape: s32[2,8,1], index: 1, kind: input, shape index: {}]
  %s2 = inlined_call_operand.vmem [shape: s32[2,1,8], index: 2, kind: input, shape index: {}]
  %s3 = inlined_call_operand.vmem [shape: bf16[2,8,32], index: 3, kind: input, shape index: {}]
  %s4 = inlined_call_operand.vmem [shape: bf16[2,8,32], index: 4, kind: input, shape index: {}]
  %s5 = inlined_call_operand.hbm [shape: bf16[2,8,128], index: 5, kind: output, shape index: {0}]
  %s6 = inlined_call_operand.hbm [shape: f32[2,1,128], index: 6, kind: output, shape index: {1}]
  %7 = xla_tuple %s5, %s6
  %s8 = sld [smem:[#allocation0]]
  $region61: #{tpu_custom_call.1} parent=0
    _
  %s10 = ssub.s32 1, %s8
  %s11 = scalar_select 0, %s10, %s8
  %12 = sst [smem:[#allocation3]] %s0
  $region1: #{tpu_custom_call.1} parent=0
    #allocation4 [shape = 'u8[4096]{0}', space=vmem, size = 0x1000, scoped, tag = 'output window, operand 0']
    #allocation5 [shape = 's32[2]{0}', space=sflag, size = 0x8, scoped, tag = 'scoped memory for tpu_custom_call.1']
    #allocation6 [shape = 'u8[1024]{0}', space=vmem, size = 0x400, scoped, tag = 'output window, operand 1']
    #allocation7 [shape = 's32[2]{0}', space=sflag, size = 0x8, scoped, tag = 'scoped memory for tpu_custom_call.1']
    %13 = vsyncpa [#allocation5], 0
    %s14 = scalar_lea.sflag [#allocation5], 1
    %15 = vsyncpa %s14, 0
    %16 = vsyncpa [#allocation7], 0
    %s17 = scalar_lea.sflag [#allocation7], 1
    %18 = vsyncpa %s17, 0
    loop: start=0, step=1, limit=4
    $region2: #{tpu_custom_call.1} parent=1 // loop_pre_header
      _
    $region3: #{tpu_custom_call.1} parent=1 // loop_header
      %s20 = sphi 0, %s24
      %p21 = scmp.ge.s32.totalorder %s20, 4
      %s28 = sphi 0, %s28
      %s30 = sphi 0, %s28
      %s31 = sphi 0, %s30
      %s45 = sphi 0, %s31
      %s51 = sphi 0, %s53
      %s54 = sphi 0, %s51
      %s55 = sphi 0, %s54
      %s71 = sphi 0, %s55
      %s77 = sphi 0, %s79
      %s80 = sphi 0, %s77
      %s81 = sphi 0, %s80
      %s97 = sphi 0, %s81
      %s103 = sphi 0, %s105
      %s106 = sphi 0, %s103
      %s107 = sphi 0, %s106
      %s123 = sphi 0, %s107
      %s129 = sphi 0, %s131
      %s132 = sphi 0, %s129
      %s133 = sphi 0, %s132
      %s149 = sphi 0, %s133
      %s155 = sphi 0, %s157
      %s158 = sphi 0, %s155
      %s159 = sphi 0, %s158
      %s175 = sphi 0, %s159
      %s181 = sphi 0, %s183
      %s184 = sphi 0, %s181
      %s185 = sphi 0, %s184
      %s201 = sphi 0, %s185
    $region4: #{tpu_custom_call.1} parent=1 // loop_header_branch
      %23 = sbr.rel (%p21) target = $region8
    $region5: #{tpu_custom_call.1} parent=1 // loop_body
      %s25 = ssub.s32 %s20, 1
      %s26 = ssub.s32 %s20, 2
      %s27 = sadd.s32 %s20, 1
      %s29 = sadd.s32 %s28, 1
      %p32 = scmp.eq.s32.totalorder %s20, 1
      %p33 = scmp.ne.s32.totalorder %s28, %s30
      %p34 = scmp.eq.s32.totalorder %s20, 0
      %p35 = por %p33, %p34
      %p36 = scmp.ne.s32.totalorder %s28, %s30
      %p37 = scmp.eq.s32.totalorder %s25, 1
      %p38 = por %p36, %p37
      %p39 = scmp.ne.s32.totalorder %s30, %s31
      %p40 = scmp.eq.s32.totalorder %s25, 0
      %p41 = por %p39, %p40
      %p42 = scmp.ne.s32.totalorder %s30, %s31
      %p43 = scmp.eq.s32.totalorder %s26, 1
      %p44 = por %p42, %p43
      %p46 = scmp.ne.s32.totalorder %s31, %s45
      %p47 = scmp.eq.s32.totalorder %s26, 0
      %p48 = por %p46, %p47
      %s49 = ssub.s32 %s20, %s27
      %p50 = scmp.eq.s32.totalorder %s49, 0
      %s52 = sadd.s32 %s51, 1
      %s53 = scalar_select %p50, %s51, %s52
      %p56 = pneg %p50
      %p57 = scmp.eq.s32.totalorder %s20, 1
      %p58 = por %p56, %p57
      %p59 = scmp.ne.s32.totalorder %s51, %s54
      %p60 = scmp.eq.s32.totalorder %s20, 0
      %p61 = por %p59, %p60
      %p62 = scmp.ne.s32.totalorder %s51, %s54
      %p63 = scmp.eq.s32.totalorder %s25, 1
      %p64 = por %p62, %p63
      %p65 = scmp.ne.s32.totalorder %s54, %s55
      %p66 = scmp.eq.s32.totalorder %s25, 0
      %p67 = por %p65, %p66
      %p68 = scmp.ne.s32.totalorder %s54, %s55
      %p69 = scmp.eq.s32.totalorder %s26, 1
      %p70 = por %p68, %p69
      %p72 = scmp.ne.s32.totalorder %s55, %s71
      %p73 = scmp.eq.s32.totalorder %s26, 0
      %p74 = por %p72, %p73
      %s75 = ssub.s32 %s20, %s27
      %p76 = scmp.eq.s32.totalorder %s75, 0
      %s78 = sadd.s32 %s77, 1
      %s79 = scalar_select %p76, %s77, %s78
      %p82 = pneg %p76
      %p83 = scmp.eq.s32.totalorder %s20, 1
      %p84 = por %p82, %p83
      %p85 = scmp.ne.s32.totalorder %s77, %s80
      %p86 = scmp.eq.s32.totalorder %s20, 0
      %p87 = por %p85, %p86
      %p88 = scmp.ne.s32.totalorder %s77, %s80
      %p89 = scmp.eq.s32.totalorder %s25, 1
      %p90 = por %p88, %p89
      %p91 = scmp.ne.s32.totalorder %s80, %s81
      %p92 = scmp.eq.s32.totalorder %s25, 0
      %p93 = por %p91, %p92
      %p94 = scmp.ne.s32.totalorder %s80, %s81
      %p95 = scmp.eq.s32.totalorder %s26, 1
      %p96 = por %p94, %p95
      %p98 = scmp.ne.s32.totalorder %s81, %s97
      %p99 = scmp.eq.s32.totalorder %s26, 0
      %p100 = por %p98, %p99
      %s101 = ssub.s32 %s20, %s27
      %p102 = scmp.eq.s32.totalorder %s101, 0
      %s104 = sadd.s32 %s103, 1
      %s105 = scalar_select %p102, %s103, %s104
      %p108 = pneg %p102
      %p109 = scmp.eq.s32.totalorder %s20, 1
      %p110 = por %p108, %p109
      %p111 = scmp.ne.s32.totalorder %s103, %s106
      %p112 = scmp.eq.s32.totalorder %s20, 0
      %p113 = por %p111, %p112
      %p114 = scmp.ne.s32.totalorder %s103, %s106
      %p115 = scmp.eq.s32.totalorder %s25, 1
      %p116 = por %p114, %p115
      %p117 = scmp.ne.s32.totalorder %s106, %s107
      %p118 = scmp.eq.s32.totalorder %s25, 0
      %p119 = por %p117, %p118
      %p120 = scmp.ne.s32.totalorder %s106, %s107
      %p121 = scmp.eq.s32.totalorder %s26, 1
      %p122 = por %p120, %p121
      %p124 = scmp.ne.s32.totalorder %s107, %s123
      %p125 = scmp.eq.s32.totalorder %s26, 0
      %p126 = por %p124, %p125
      %s127 = ssub.s32 %s20, %s27
      %p128 = scmp.eq.s32.totalorder %s127, 0
      %s130 = sadd.s32 %s129, 1
      %s131 = scalar_select %p128, %s129, %s130
      %p134 = pneg %p128
      %p135 = scmp.eq.s32.totalorder %s20, 1
      %p136 = por %p134, %p135
      %p137 = scmp.ne.s32.totalorder %s129, %s132
      %p138 = scmp.eq.s32.totalorder %s20, 0
      %p139 = por %p137, %p138
      %p140 = scmp.ne.s32.totalorder %s129, %s132
      %p141 = scmp.eq.s32.totalorder %s25, 1
      %p142 = por %p140, %p141
      %p143 = scmp.ne.s32.totalorder %s132, %s133
      %p144 = scmp.eq.s32.totalorder %s25, 0
      %p145 = por %p143, %p144
      %p146 = scmp.ne.s32.totalorder %s132, %s133
      %p147 = scmp.eq.s32.totalorder %s26, 1
      %p148 = por %p146, %p147
      %p150 = scmp.ne.s32.totalorder %s133, %s149
      %p151 = scmp.eq.s32.totalorder %s26, 0
      %p152 = por %p150, %p151
      %s153 = ssub.s32 %s20, %s27
      %p154 = scmp.eq.s32.totalorder %s153, 0
      %s156 = sadd.s32 %s155, 1
      %s157 = scalar_select %p154, %s155, %s156
      %p160 = pneg %p154
      %p161 = scmp.eq.s32.totalorder %s20, 1
      %p162 = por %p160, %p161
      %p163 = scmp.ne.s32.totalorder %s155, %s158
      %p164 = scmp.eq.s32.totalorder %s20, 0
      %p165 = por %p163, %p164
      %p166 = scmp.ne.s32.totalorder %s155, %s158
      %p167 = scmp.eq.s32.totalorder %s25, 1
      %p168 = por %p166, %p167
      %p169 = scmp.ne.s32.totalorder %s158, %s159
      %p170 = scmp.eq.s32.totalorder %s25, 0
      %p171 = por %p169, %p170
      %p172 = scmp.ne.s32.totalorder %s158, %s159
      %p173 = scmp.eq.s32.totalorder %s26, 1
      %p174 = por %p172, %p173
      %p176 = scmp.ne.s32.totalorder %s159, %s175
      %p177 = scmp.eq.s32.totalorder %s26, 0
      %p178 = por %p176, %p177
      %s179 = ssub.s32 %s20, %s27
      %p180 = scmp.eq.s32.totalorder %s179, 0
      %s182 = sadd.s32 %s181, 1
      %s183 = scalar_select %p180, %s181, %s182
      %p186 = pneg %p180
      %p187 = scmp.eq.s32.totalorder %s20, 1
      %p188 = por %p186, %p187
      %p189 = scmp.ne.s32.totalorder %s181, %s184
      %p190 = scmp.eq.s32.totalorder %s20, 0
      %p191 = por %p189, %p190
      %p192 = scmp.ne.s32.totalorder %s181, %s184
      %p193 = scmp.eq.s32.totalorder %s25, 1
      %p194 = por %p192, %p193
      %p195 = scmp.ne.s32.totalorder %s184, %s185
      %p196 = scmp.eq.s32.totalorder %s25, 0
      %p197 = por %p195, %p196
      %p198 = scmp.ne.s32.totalorder %s184, %s185
      %p199 = scmp.eq.s32.totalorder %s26, 1
      %p200 = por %p198, %p199
      %p202 = scmp.ne.s32.totalorder %s185, %s201
      %p203 = scmp.eq.s32.totalorder %s26, 0
      %p204 = por %p202, %p203
      %p205 = scmp.le.s32.totalorder 1, %s20
      %p206 = scmp.lt.s32.totalorder %s20, 3
      %p207 = pnand %p205, %p206
      %p208 = pneg %p207
      // Predicated region
      $region9: #{tpu_custom_call.1} parent=5 // pred_check
        _
      $region10: #{tpu_custom_call.1} parent=5 // pred_check_branch
        %210 = sbr.rel (%p207) target = $region12
      $region11: #{tpu_custom_call.1} parent=5 // pred_region
        %s211 = ssub.s32 %s20, 1
        // Predicated region
        $region13: #{tpu_custom_call.1} parent=11 // pred_check
          %p212 = pneg %p41
        $region14: #{tpu_custom_call.1} parent=11 // pred_check_branch
          %214 = sbr.rel (%p212) target = $region16
        $region15: #{tpu_custom_call.1} parent=11 // pred_region
          _
        $region16: #{tpu_custom_call.1} parent=11 // pred_fallthru
          _
      $region12: #{tpu_custom_call.1} parent=5 // pred_fallthru
        _
      %p215 = scmp.lt.s32.totalorder %s20, 2
      // Predicated region
      $region17: #{tpu_custom_call.1} parent=5 // pred_check
        %p216 = pneg %p215
      $region18: #{tpu_custom_call.1} parent=5 // pred_check_branch
        %218 = sbr.rel (%p216) target = $region20
      $region19: #{tpu_custom_call.1} parent=5 // pred_region
        // Predicated region
        $region21: #{tpu_custom_call.1} parent=19 // pred_check
          %p219 = pneg %p61
        $region22: #{tpu_custom_call.1} parent=19 // pred_check_branch
          %221 = sbr.rel (%p219) target = $region24
        $region23: #{tpu_custom_call.1} parent=19 // pred_region
          %p222 = scmp.lt.s32.totalorder %s20, 1
          %s223 = scalar_select %p222, %s20, 1
          %s224 = smul.addr %s223, 8
          %s225 = scalar_lea.vmem %s1, %s224
        $region24: #{tpu_custom_call.1} parent=19 // pred_fallthru
          _
        // Predicated region
        $region25: #{tpu_custom_call.1} parent=19 // pred_check
          %p226 = pneg %p87
        $region26: #{tpu_custom_call.1} parent=19 // pred_check_branch
          %228 = sbr.rel (%p226) target = $region28
        $region27: #{tpu_custom_call.1} parent=19 // pred_region
          %p229 = scmp.lt.s32.totalorder %s20, 1
          %s230 = scalar_select %p229, %s20, 1
          %s231 = scalar_lea.vmem %s2, %s230
        $region28: #{tpu_custom_call.1} parent=19 // pred_fallthru
          _
        // Predicated region
        $region29: #{tpu_custom_call.1} parent=19 // pred_check
          %p232 = pneg %p113
        $region30: #{tpu_custom_call.1} parent=19 // pred_check_branch
          %234 = sbr.rel (%p232) target = $region32
        $region31: #{tpu_custom_call.1} parent=19 // pred_region
          %p235 = scmp.lt.s32.totalorder %s20, 1
          %s236 = scalar_select %p235, %s20, 1
          %s237 = smul.addr %s236, 4
          %s238 = scalar_lea.vmem %s3, %s237
        $region32: #{tpu_custom_call.1} parent=19 // pred_fallthru
          _
        // Predicated region
        $region33: #{tpu_custom_call.1} parent=19 // pred_check
          %p239 = pneg %p139
        $region34: #{tpu_custom_call.1} parent=19 // pred_check_branch
          %241 = sbr.rel (%p239) target = $region36
        $region35: #{tpu_custom_call.1} parent=19 // pred_region
          %p242 = scmp.lt.s32.totalorder %s20, 1
          %s243 = scalar_select %p242, %s20, 1
          %s244 = smul.addr %s243, 4
          %s245 = scalar_lea.vmem %s4, %s244
        $region36: #{tpu_custom_call.1} parent=19 // pred_fallthru
          _
      $region20: #{tpu_custom_call.1} parent=5 // pred_fallthru
        _
      %p246 = scmp.le.s32.totalorder 1, %s20
      %p247 = scmp.lt.s32.totalorder %s20, 3
      %p248 = pnand %p246, %p247
      %p249 = pneg %p248
      // Predicated region
      $region37: #{tpu_custom_call.1} parent=5 // pred_check
        _
      $region38: #{tpu_custom_call.1} parent=5 // pred_check_branch
        %251 = sbr.rel (%p248) target = $region40
      $region39: #{tpu_custom_call.1} parent=5 // pred_region
        %s252 = ssub.s32 %s20, 1
        %p253 = pneg %p41
        %p254 = pneg %p38
        %p255 = scmp.lt.s32.totalorder %s25, 1
        %s256 = scalar_select %p255, %s25, 1
        %s257 = smul.addr %s256, 8
        %s258 = scalar_lea.vmem %s1, %s257
        %p259 = pneg %p67
        %p260 = pneg %p64
        %p261 = scmp.lt.s32.totalorder %s25, 1
        %s262 = scalar_select %p261, %s25, 1
        %s263 = scalar_lea.vmem %s2, %s262
        %p264 = pneg %p93
        %p265 = pneg %p90
        %p266 = scmp.lt.s32.totalorder %s25, 1
        %s267 = scalar_select %p266, %s25, 1
        %s268 = smul.addr %s267, 4
        %s269 = scalar_lea.vmem %s3, %s268
        %p270 = pneg %p119
        %p271 = pneg %p116
        %p272 = scmp.lt.s32.totalorder %s25, 1
        %s273 = scalar_select %p272, %s25, 1
        %s274 = smul.addr %s273, 4
        %s275 = scalar_lea.vmem %s4, %s274
        %p276 = pneg %p145
        %p277 = pneg %p142
        %p278 = pneg %p171
        %p279 = pneg %p168
        %s280 = sand.u32 %s158, 1
        %s281 = scalar_lea.sflag [#allocation5], %s280
        %s282 = sand.u32 %s158, 1
        %s283 = smul.addr %s282, 4
        %s284 = scalar_lea.vmem [#allocation4], %s283
        %p285 = pneg %p197
        %p286 = pneg %p194
        %s287 = sand.u32 %s184, 1
        %s288 = scalar_lea.sflag [#allocation7], %s287
        %s289 = sand.u32 %s184, 1
        %s290 = scalar_lea.vmem [#allocation6], %s289
        %p291 = scmp.lt.s32.totalorder %s25, 1
        %s292 = scalar_select %p291, %s25, 1
        %s293 = smul.addr %s292, 8
        %s294 = scalar_lea.vmem %s1, %s293
        %p295 = scmp.lt.s32.totalorder %s25, 1
        %s296 = scalar_select %p295, %s25, 1
        %s297 = scalar_lea.vmem %s2, %s296
        %p298 = scmp.lt.s32.totalorder %s25, 1
        %s299 = scalar_select %p298, %s25, 1
        %s300 = smul.addr %s299, 4
        %s301 = scalar_lea.vmem %s3, %s300
        %p302 = scmp.lt.s32.totalorder %s25, 1
        %s303 = scalar_select %p302, %s25, 1
        %s304 = smul.addr %s303, 4
        %s305 = scalar_lea.vmem %s4, %s304
        %v307 = vld [vmem:[%s301] sm:$0xf]
        %v308 = vld [vmem:[%s305] sm:$0xf]
        %v309 = vld [vmem:[%s294] sm:$0xff]
        %v310 = vld [vmem:[%s297] sm:$0x1]
        %s311 = sld [smem:[#allocation3]]
        %v312 = vunpack.c.l.bf16 %v307
        %v313 = vunpack.c.l.bf16 %v308
        %v314 = vmul.f32 %v312, %v312
        %vm315 = vcmask 261120
        %v316 = vsel %vm315, %v314, 0.0
        %317 = vadd.xlane.f32.xlu0 %v316
        %v318 = vpop.xlane.xlu0 %317
        %v319 = vmax.f32 %v318, 1e-16
        %v320 = vrsqrt.pop %v319
        %v321 = vmul.f32 %v312, %v320
        %v322 = vpack.c.bf16 %v321, %v321
        %v323 = vmul.f32 %v313, %v313
        %v324 = vsel %vm315, %v323, 0.0
        %325 = vadd.xlane.f32.xlu0 %v324
        %v326 = vpop.xlane.xlu0 %325
        %v327 = vmax.f32 %v326, 1e-16
        %v328 = vrsqrt.pop %v327
        %v329 = vmul.f32 %v313, %v328
        %v330 = vpack.c.bf16 %v329, %v329
        %vm331 = vcmask 261124
        %332 = vst.msk [vmem:[#allocation2] sm:$0xf0] %vm331, 0
        %333 = vst.msk [vmem:[#allocation2 + $0x8] sm:$0xff] %vm315, 0
        %334 = vst.msk [vmem:[#allocation2 + $0x10] sm:$0xff] %vm315, 0
        %335 = vst.msk [vmem:[#allocation2 + $0x18] sm:$0xff] %vm315, 0
        %336 = vst.msk [vmem:[#allocation2 + $0x20] sm:$0xff] %vm315, 0
        %337 = vst.msk [vmem:[#allocation2 + $0x28] sm:$0xff] %vm315, 0
        %338 = vst.msk [vmem:[#allocation2 + $0x30] sm:$0xff] %vm315, 0
        %339 = vst.msk [vmem:[#allocation2 + $0x38] sm:$0xff] %vm315, 0
        %vm340 = vcmask 257024
        %341 = vst.msk [vmem:[#allocation2] sm:$0xf] %vm340, %v330
        %v342 = vld [vmem:[#allocation2] sm:$0xff]
        %v343 = vld [vmem:[#allocation2 + $0x8] sm:$0xff]
        %v344 = vld [vmem:[#allocation2 + $0x10] sm:$0xff]
        %v345 = vld [vmem:[#allocation2 + $0x18] sm:$0xff]
        %v346 = vld [vmem:[#allocation2 + $0x20] sm:$0xff]
        %v347 = vld [vmem:[#allocation2 + $0x28] sm:$0xff]
        %v348 = vld [vmem:[#allocation2 + $0x30] sm:$0xff]
        %v349 = vld [vmem:[#allocation2 + $0x38] sm:$0xff]
        %v351 = vsel %vm315, %v322, 0
        %v354 = vsel %vm315, %v342, 0
        %v357 = vsel %vm315, %v343, 0
        %v360 = vsel %vm315, %v344, 0
        %v363 = vsel %vm315, %v345, 0
        %v366 = vsel %vm315, %v346, 0
        %v369 = vsel %vm315, %v347, 0
        %v372 = vsel %vm315, %v348, 0
        %v375 = vsel %vm315, %v349, 0
        %377 = vmatprep.subr.bf16.mxu0 0
        %378 = vmatpush1.bf16.xpose.msra.mxu0 %v354
        %379 = vmatprep.subr.bf16.mxu0 0
        %380 = vmatpush1.bf16.xpose.msra.mxu0 %v357
        %381 = vmatprep.subr.bf16.mxu0 0
        %382 = vmatpush1.bf16.xpose.msra.mxu0 %v360
        %383 = vmatprep.subr.bf16.mxu0 0
        %384 = vmatpush1.bf16.xpose.msra.mxu0 %v363
        %385 = vmatprep.subr.bf16.mxu0 0
        %386 = vmatpush1.bf16.xpose.msra.mxu0 %v366
        %387 = vmatprep.subr.bf16.mxu0 0
        %388 = vmatpush1.bf16.xpose.msra.mxu0 %v369
        %389 = vmatprep.subr.bf16.mxu0 0
        %390 = vmatpush1.bf16.xpose.msra.mxu0 %v372
        %391 = vmatprep.subr.bf16.mxu0 0
        %392 = vmatpush1.bf16.xpose.msra.mxu0 %v375
        %393 = vmatprep.subr.bf16.mxu0 0
        %394 = vmatpush1.bf16.xpose.msra.mxu0 0
        %395 = vmatprep.subr.bf16.mxu0 0
        %396 = vmatpush1.bf16.xpose.msra.mxu0 0
        %397 = vmatprep.subr.bf16.mxu0 0
        %398 = vmatpush1.bf16.xpose.msra.mxu0 0
        %399 = vmatprep.subr.bf16.mxu0 0
        %400 = vmatpush1.bf16.xpose.msra.mxu0 0
        %401 = vmatprep.subr.bf16.mxu0 0
        %402 = vmatpush1.bf16.xpose.msra.mxu0 0
        %403 = vmatprep.subr.bf16.mxu0 0
        %404 = vmatpush1.bf16.xpose.msra.mxu0 0
        %405 = vmatprep.subr.bf16.mxu0 0
        %406 = vmatpush1.bf16.xpose.msra.mxu0 0
        %407 = vmatprep.subr.bf16.mxu0 0
        %408 = vmatpush1.bf16.xpose.msra.mxu0 0
        %409 = vmatprep.mubr.bf16.mxu0 0
        %410 = vmatmul.mubr.bf16.gmra.mrb[0].mxu0 %v351
        %v411 = vpop.f32.mrb[0].mxu0
        %v412 = vadd.f32 0.0, %v411
        %v413 = vpop.f32.mrb[0].mxu0
        %v414 = vpop.f32.mrb[0].mxu0
        %v415 = vpop.f32.mrb[0].mxu0
        %416 = vdwg.mxu0
        %v417 = vlaneseq
        %v418 = vand.u32 %v417, 127
        %vm419 = vcmp.lt.s32.totalorder %v418, 8
        %vm420 = vcmp.ne.s32.totalorder %v309, 4294967295
        %v421 = vsel %vm420, 1, 0
        %v422 = vcvt.s32.f32 %v421
        %vm423 = vcmask 7168
        %v424 = vsel %vm423, %v422, 0.0
        %v425 = vrot.slane %v424, 4
        %v426 = vadd.f32 %v424, %v425
        %v427 = vrot.slane %v426, 2
        %v428 = vadd.f32 %v426, %v427
        %v429 = vrot.slane %v428, 1
        %v430 = vadd.f32 %v428, %v429
        %v431 = vmax.f32 %v430, 1.0
        %432 = vset.pattern.permute.xlu0 0
        %433 = vperm.xlu0 %432, %v309
        %v434 = vpop.permute.xlu0 %433
        %v435 = vlaneseq
        %v436 = vshrl.u32 %v435, 7
        %v437 = vsub.s32 0, %v436
        %v438 = vrot.slane %v310, %v437
        %vm439 = vcmp.eq.s32.totalorder %v434, %v438
        %v440 = vsel %vm439, %v418, 8
        %vm441 = vcmask 64512
        %v442 = vsel %vm441, %v440, 2147483647
        %v443 = vand.u32 %v442, 65535
        %v444 = vshra.s32 %v442, 16
        %v445 = vcvt.s32.f32 %v443
        %v446 = vcvt.s32.f32 %v444
        %447 = vmin.xlane.f32.xlu0 %v446
        %v448 = vpop.xlane.xlu0 %447
        %vm449 = vcmp.eq.f32.partialorder %v446, %v448
        %v450 = vsel %vm449, %v445, inf
        %451 = vmin.xlane.f32.xlu0 %v450
        %v452 = vpop.xlane.xlu0 %451
        %v453 = vcvt.f32.s32 %v452
        %v454 = vcvt.f32.s32 %v448
        %v455 = vshll.u32 %v454, 16
        %v456 = vadd.s32 %v455, %v453
        %vm457 = vcmp.eq.s32.totalorder %v418, %v456
        %vm458 = vcmp.eq.s32.totalorder %v418, 8
        %v459 = vsel %vm419, %v412, -1e+09
        %v460 = vstv %s311
        %v461 = vsel %vm458, %v460, %v459
        %vm462 = vmand %vm457, %vm419
        %v463 = vsub.f32 1.0, %v412
        %v464 = vsub.f32 %v412, 0.5
        %v465 = vmax.f32 %v464, 0.0
        %v466 = vsel %vm462, %v463, %v465
        %467 = vadd.xlane.f32.xlu0 %v466
        %v468 = vpop.xlane.xlu0 %467
        %v469 = vmul.f32 %v468, %v422
        %v470 = vsel %vm423, %v469, 0.0
        %v471 = vrot.slane %v470, 4
        %v472 = vadd.f32 %v470, %v471
        %v473 = vrot.slane %v472, 2
        %v474 = vadd.f32 %v472, %v473
        %v475 = vrot.slane %v474, 1
        %v476 = vadd.f32 %v474, %v475
        %v477 = vmul.f32 %v476, 0.125
        %v478 = vsel %vm457, %v461, 0.0
        %v479 = vmax.f32 %v461, 0.0
        %v480 = vsub.f32 %v479, %v478
        %v481 = vand.u32 2147483647, %v461
        %v482 = vsub.f32 0.0, %v481
        %v483 = vmul.f32 %v482, 1.442695
        %v484 = vpow.pop %v483
        %v485 = vadd.f32 %v484, 1.0
        %v486 = vlog2.pop %v485
        %v487 = vmul.f32 %v486, 0.6931472
        %v488 = vadd.f32 %v480, %v487
        %489 = vadd.xlane.f32.xlu0 %v488
        %v490 = vpop.xlane.xlu0 %489
        %v491 = vmul.f32 %v490, %v422
        %v492 = vsel %vm423, %v491, 0.0
        %v493 = vrot.slane %v492, 4
        %v494 = vadd.f32 %v492, %v493
        %v495 = vrot.slane %v494, 2
        %v496 = vadd.f32 %v494, %v495
        %v497 = vrot.slane %v496, 1
        %v498 = vadd.f32 %v496, %v497
        %v499 = vmul.f32 %v431, 9.0
        %v500 = vrcp.pop %v499
        %v501 = vmul.f32 %v498, %v500
        %502 = vmax.xlane.f32.xlu0 %v461
        %v503 = vpop.xlane.xlu0 %502
        %v504 = vsub.f32 %v461, %v503
        %v505 = vmul.f32 %v504, 1.442695
        %v506 = vpow.pop %v505
        %507 = vadd.xlane.f32.xlu0 %v506
        %v508 = vpop.xlane.xlu0 %507
        %v509 = vlog2.pop %v508
        %v510 = vmul.f32 %v509, 0.6931472
        %v511 = vadd.f32 %v503, %v510
        %512 = vadd.xlane.f32.xlu0 %v478
        %v513 = vpop.xlane.xlu0 %512
        %v514 = vsub.f32 %v511, %v513
        %v515 = vmul.f32 %v514, %v422
        %v516 = vsel %vm423, %v515, 0.0
        %v517 = vrot.slane %v516, 4
        %v518 = vadd.f32 %v516, %v517
        %v519 = vrot.slane %v518, 2
        %v520 = vadd.f32 %v518, %v519
        %v521 = vrot.slane %v520, 1
        %v522 = vadd.f32 %v520, %v521
        %v523 = vrcp.pop %v431
        %v524 = vmul.f32 %v522, %v523
        %v525 = vpack.c.bf16 %v461, %v461
        %526 = vst [vmem:[%s284] sm:$0xf] %v525
        %vm527 = vcmp.eq.s32.totalorder %v418, 0
        %vm528 = vcmp.eq.s32.totalorder %v418, 1
        %vm529 = vcmp.eq.s32.totalorder %v418, 2
        %vm530 = vcmp.eq.s32.totalorder %v418, 3
        %532 = vset.pattern.permute.xlu0 0
        %533 = vperm.xlu0 %532, %v430
        %v534 = vpop.permute.xlu0 %533
        %v536 = vsel %vm530, %v534, 0.0
        %538 = vset.pattern.permute.xlu0 0
        %539 = vperm.xlu0 %538, %v524
        %v540 = vpop.permute.xlu0 %539
        %v542 = vsel %vm529, %v540, %v536
        %544 = vset.pattern.permute.xlu0 0
        %545 = vperm.xlu0 %544, %v501
        %v546 = vpop.permute.xlu0 %545
        %v548 = vsel %vm528, %v546, %v542
        %550 = vset.pattern.permute.xlu0 0
        %551 = vperm.xlu0 %550, %v477
        %v552 = vpop.permute.xlu0 %551
        %v554 = vsel %vm527, %v552, %v548
        %555 = vst [vmem:[%s290] sm:$0x1] %v554
        %s556 = sand.u32 %s158, 1
        %s557 = scalar_lea.sflag [#allocation5], %s556
        %s558 = sand.u32 %s158, 1
        %s559 = smul.addr %s558, 4
        %s560 = scalar_lea.vmem [#allocation4], %s559
        %s561 = sand.u32 %s184, 1
        %s562 = scalar_lea.sflag [#allocation7], %s561
        %s563 = sand.u32 %s184, 1
        %s564 = scalar_lea.vmem [#allocation6], %s563
        // Predicated region
        $region41: #{tpu_custom_call.1} parent=39 // pred_check
          %p565 = pneg %p168
        $region42: #{tpu_custom_call.1} parent=39 // pred_check_branch
          %567 = sbr.rel (%p565) target = $region44
        $region43: #{tpu_custom_call.1} parent=39 // pred_region
          %s569 = ssub.s32 64, 64
          %570 = vsyncadd %s557, %s569
          %s571 = smul.addr %s25, 64
          %s572 = scalar_lea.hbm %s5, %s571
          %s574 = sshll.u32 %s560, 4
          %s575 = int_to_ptr.vmem [resolvable:$true] %s574
          %577 = dma.vmem_to_hbm [thread:$0]  %s575, 64, %s572, %s557
        $region44: #{tpu_custom_call.1} parent=39 // pred_fallthru
          _
        // Predicated region
        $region45: #{tpu_custom_call.1} parent=39 // pred_check
          %p578 = pneg %p194
        $region46: #{tpu_custom_call.1} parent=39 // pred_check_branch
          %580 = sbr.rel (%p578) target = $region48
        $region47: #{tpu_custom_call.1} parent=39 // pred_region
          %s582 = ssub.s32 16, 16
          %583 = vsyncadd %s562, %s582
          %s584 = smul.addr %s25, 16
          %s585 = scalar_lea.hbm %s6, %s584
          %s587 = sshll.u32 %s564, 4
          %s588 = int_to_ptr.vmem [resolvable:$true] %s587
          %590 = dma.vmem_to_hbm [thread:$0]  %s588, 16, %s585, %s562
        $region48: #{tpu_custom_call.1} parent=39 // pred_fallthru
          _
      $region40: #{tpu_custom_call.1} parent=5 // pred_fallthru
        _
      %p591 = scmp.le.s32.totalorder 2, %s20
      // Predicated region
      $region49: #{tpu_custom_call.1} parent=5 // pred_check
        %p592 = pneg %p591
      $region50: #{tpu_custom_call.1} parent=5 // pred_check_branch
        %594 = sbr.rel (%p592) target = $region52
      $region51: #{tpu_custom_call.1} parent=5 // pred_region
        %s595 = ssub.s32 %s20, 2
        // Predicated region
        $region53: #{tpu_custom_call.1} parent=51 // pred_check
          %p596 = pneg %p174
        $region54: #{tpu_custom_call.1} parent=51 // pred_check_branch
          %598 = sbr.rel (%p596) target = $region56
        $region55: #{tpu_custom_call.1} parent=51 // pred_region
          %s599 = sand.u32 %s159, 1
          %s600 = scalar_lea.sflag [#allocation5], %s599
          %s601 = sand.u32 %s159, 1
          %s602 = smul.addr %s601, 4
          %s603 = scalar_lea.vmem [#allocation4], %s602
          %604 = dma.done %s600, 64
        $region56: #{tpu_custom_call.1} parent=51 // pred_fallthru
          _
        // Predicated region
        $region57: #{tpu_custom_call.1} parent=51 // pred_check
          %p605 = pneg %p200
        $region58: #{tpu_custom_call.1} parent=51 // pred_check_branch
          %607 = sbr.rel (%p605) target = $region60
        $region59: #{tpu_custom_call.1} parent=51 // pred_region
          %s608 = sand.u32 %s185, 1
          %s609 = scalar_lea.sflag [#allocation7], %s608
          %s610 = sand.u32 %s185, 1
          %s611 = scalar_lea.vmem [#allocation6], %s610
          %612 = dma.done %s609, 16
        $region60: #{tpu_custom_call.1} parent=51 // pred_fallthru
          _
      $region52: #{tpu_custom_call.1} parent=5 // pred_fallthru
        _
    $region6: #{tpu_custom_call.1} parent=1 // loop_footer
      %s24 = sadd.s32 1, %s20
    $region7: #{tpu_custom_call.1} parent=1 // loop_footer_branch
      %19 = sbr.rel target = $region3
    $region8: #{tpu_custom_call.1} parent=1 // loop_exit
      _
    %613 = vsyncpa [#allocation5], 1
    %s614 = scalar_lea.sflag [#allocation5], 1
    %615 = vsyncpa %s614, 1
    %616 = vsyncpa [#allocation7], 1
    %s617 = scalar_lea.sflag [#allocation7], 1
    %618 = vsyncpa %s617, 1

</llo_original>
